<compile_context>
chip_gen: v7x
topology: tpu7x:2x2x1
jax: 0.10.0
libtpu: 0.0.40
codegen_flags: <defaults>
</compile_context>

<pallas_src>
from functools import partial

import jax
import jax.numpy as jnp
from jax.experimental import pallas as pl
from jax.experimental.pallas import tpu as pltpu


def _detect_conv_kernel(x_ref, w_ref, b_ref, o_ref):
    # x_ref: (1, C, tS)          f32  activation tile (NCHW, H*W flattened)
    # w_ref: (na, C, no_pad)     bf16 1x1-conv weights, lane-padded on `no`
    # b_ref: (na, 1, no_pad)     f32  bias (padded lanes are zero)
    # o_ref: (1, na, tS, no_pad)      output tile, already in permuted layout
    na = w_ref.shape[0]
    # One f32 transpose per grid step (XLU slot, hidden under MXU/stores), then
    # a standard (tS, C) @ (C, no_pad) matmul per anchor with f32 accumulation.
    xt = jnp.transpose(x_ref[0]).astype(jnp.bfloat16)          # (tS, C)
    for a in range(na):                                         # static unroll
        acc = jnp.dot(xt, w_ref[a], preferred_element_type=jnp.float32)
        o_ref[0, a] = (acc + b_ref[a]).astype(o_ref.dtype)


def _pick_spatial_tile(s, c, na, no_pad, in_item, out_item, budget=16 << 20):
    """Largest 128-aligned spatial tile whose double-buffered blocks fit budget."""
    if s <= 256:
        return s                                # single full-extent tile
    for ts in (2048, 1024, 512, 256, 128):
        if ts > s:
            continue
        need = 2 * c * ts * in_item + 2 * na * ts * no_pad * out_item
        if need <= budget:
            return ts
    return 128


def detect_conv1x1(x_flat, w_pad, b_pad, *, out_dtype=None):
    """x_flat: (bs, C, S); w_pad: (na, C, no_pad) bf16; b_pad: (na, 1, no_pad) f32
    -> (bs, na, S, no_pad)   (the 1x1-conv output already in Detect's permuted layout)."""
    bs, c, s = x_flat.shape
    na, cw, no_pad = w_pad.shape
    assert cw == c, (cw, c)
    out_dtype = x_flat.dtype if out_dtype is None else out_dtype
    in_item = jnp.dtype(x_flat.dtype).itemsize
    out_item = jnp.dtype(out_dtype).itemsize

    ts = _pick_spatial_tile(s, c, na, no_pad, in_item, out_item)
    grid = (pl.cdiv(s, ts), bs)                 # spatial-major: feeds both TCs on v7x

    # VMEM working set: double-buffered activation/output blocks + resident W/b.
    est = (2 * c * ts * in_item
           + 2 * na * ts * no_pad * out_item
           + na * c * no_pad * w_pad.dtype.itemsize
           + na * no_pad * 4)
    try:
        vmem_cap = int(pltpu.get_tpu_info().vmem_capacity_bytes)
    except Exception:                           # conservative default: v7x (64 MiB)
        vmem_cap = 64 << 20
    vmem_limit = int(min((vmem_cap * 5) // 8, max(16 << 20, 2 * est)))

    cost = pl.CostEstimate(
        flops=2 * bs * s * c * na * no_pad,
        transcendentals=0,
        bytes_accessed=(bs * c * s * in_item
                        + int(w_pad.size) * w_pad.dtype.itemsize
                        + int(b_pad.size) * b_pad.dtype.itemsize
                        + bs * na * s * no_pad * out_item),
    )

    return pl.pallas_call(
        _detect_conv_kernel,
        out_shape=jax.ShapeDtypeStruct((bs, na, s, no_pad), out_dtype),
        grid_spec=pltpu.PrefetchScalarGridSpec(
            num_scalar_prefetch=0,
            grid=grid,
            in_specs=[
                pl.BlockSpec((1, c, ts), lambda si, b: (b, 0, si)),
                pl.BlockSpec((na, c, no_pad), lambda si, b: (0, 0, 0)),   # resident
                pl.BlockSpec((na, 1, no_pad), lambda si, b: (0, 0, 0)),   # resident
            ],
            out_specs=pl.BlockSpec((1, na, ts, no_pad),
                                   lambda si, b: (b, 0, si, 0)),
        ),
        compiler_params=pltpu.CompilerParams(
            dimension_semantics=("parallel", "parallel"),
            vmem_limit_bytes=vmem_limit,
        ),
        cost_estimate=cost,
    )(x_flat, w_pad, b_pad)


@partial(jax.jit, static_argnames=("na", "no"))
def _detect_level(x, w_pad, b_pad, *, na, no):
    bs, c, ny, nx = x.shape
    x_flat = x.reshape(bs, c, ny * nx)          # free: NCHW is contiguous
    # TODO(synk): pass out_dtype=jnp.bfloat16 here if the consumer accepts bf16;
    # it halves the dominant HBM write stream (kept f32 for torch parity).
    y = detect_conv1x1(x_flat, w_pad, b_pad)    # (bs, na, ny*nx, no_pad)
    no_pad = w_pad.shape[-1]
    if no_pad != no:
        y = y[..., :no]                         # drop lane padding only
    return y.reshape(bs, na, ny, nx, no)        # permute already fused in kernel


class DetectPallas:
    """JAX/Pallas equivalent of the YOLOv3 Detect head forward (training path)."""

    def __init__(self, nc=80, anchors=(), ch=(), key=None):
        self.nc = nc
        self.no = nc + 5
        self.nl = len(anchors)
        self.na = len(anchors[0]) // 2
        self.anchors = jnp.asarray(anchors, jnp.float32).reshape(self.nl, -1, 2)

        # Lane-pad `no` (the permuted last dim) to a multiple of 128 for unmasked
        # full-lane stores, but only when the head is wide enough that padding
        # does not blow up the dominant HBM write stream (perf-review gate).
        if self.no >= 64:
            self.no_pad = ((self.no + 127) // 128) * 128
        else:
            self.no_pad = self.no

        key = jax.random.PRNGKey(0) if key is None else key
        out_ch = self.no * self.na
        self.w_pad = []   # (na, C, no_pad) bf16; lanes >= no are zero
        self.b_pad = []   # (na, 1, no_pad) f32;  lanes >= no are zero
        for i, c in enumerate(ch):
            kw, kb = jax.random.split(jax.random.fold_in(key, i))
            bound = 1.0 / float(c) ** 0.5       # torch Conv2d(c, out_ch, 1) init
            w = jax.random.uniform(kw, (out_ch, c), jnp.float32, -bound, bound)
            b = jax.random.uniform(kb, (out_ch,), jnp.float32, -bound, bound)
            w_acn = jnp.transpose(w.reshape(self.na, self.no, c), (0, 2, 1))
            w_pad = (jnp.zeros((self.na, c, self.no_pad), jnp.float32)
                     .at[:, :, : self.no].set(w_acn))
            b_pad = (jnp.zeros((self.na, 1, self.no_pad), jnp.float32)
                     .at[:, 0, : self.no].set(b.reshape(self.na, self.no)))
            self.w_pad.append(w_pad.astype(jnp.bfloat16))
            self.b_pad.append(b_pad)

    def __call__(self, xs):
        """xs: list of NCHW arrays (bs, ch[i], H, W) -> list of (bs, na, H, W, no)."""
        return [
            _detect_level(xs[i], self.w_pad[i], self.b_pad[i], na=self.na, no=self.no)
            for i in range(self.nl)
        ]


def _reference_forward(det, xs):
    """Pure-JAX reference mirroring the kernel's bf16-operand / f32-accum math."""
    outs = []
    for i in range(det.nl):
        x = xs[i]
        w = det.w_pad[i][:, :, : det.no].astype(jnp.float32)   # bf16-rounded weights
        b = det.b_pad[i][:, 0, : det.no]                       # (na, no)
        xb = x.astype(jnp.bfloat16).astype(jnp.float32)        # mirror in-kernel cast
        y = jnp.einsum("acn,bchw->bahwn", w, xb,
                       precision=jax.lax.Precision.HIGHEST)
        outs.append(y + b[None, :, None, None, :])             # (bs, na, ny, nx, no)
    return outs


if __name__ == "__main__":
    # Small, Detect-consistent configuration.
    nc = 3                                     # classes -> no = 8
    anchors = ((10, 13, 16, 30, 33, 23),       # nl = 2, na = 3
               (30, 61, 62, 45, 59, 119))
    ch = (16, 32)                              # input channels per level
    bs = 2

    det = DetectPallas(nc=nc, anchors=anchors, ch=ch, key=jax.random.PRNGKey(0))

    key = jax.random.PRNGKey(0)
    k0, k1 = jax.random.split(key)
    xs = [
        jax.random.normal(k0, (bs, ch[0], 16, 16), jnp.float32),
        jax.random.normal(k1, (bs, ch[1], 8, 8), jnp.float32),
    ]

    outs = [jax.block_until_ready(o) for o in det(xs)]

    refs = _reference_forward(det, xs)
    expected_shapes = [(bs, det.na, 16, 16, det.no), (bs, det.na, 8, 8, det.no)]
    for o, r, es in zip(outs, refs, expected_shapes):
        assert o.shape == es, (o.shape, es)
        err = float(jnp.max(jnp.abs(o - r)))
        assert jnp.allclose(o, r, atol=2e-3, rtol=2e-3), err

    # Expected shapes: (2, 3, 16, 16, 8) and (2, 3, 8, 8, 8)
    print("KERNEL_OK")
</pallas_src>

<mosaic_0001>
module attributes {stable_mosaic.version = 11 : i64} {
  func.func @_detect_conv_kernel(%arg0: i32, %arg1: i32, %arg2: memref<1x16x256xf32, #tpu.memory_space<vmem>>, %arg3: memref<3x16x8xbf16, #tpu.memory_space<vmem>>, %arg4: memref<3x1x8xf32, #tpu.memory_space<vmem>>, %arg5: memref<1x3x256x8xf32, #tpu.memory_space<vmem>>) attributes {dimension_semantics = [#tpu.dimension_semantics<parallel>, #tpu.dimension_semantics<parallel>], iteration_bounds = array<i64: 1, 2>, scalar_prefetch = 0 : i64, scratch_operands = 0 : i64, tpu.core_type = #tpu.core_type<tc>, window_params = [{transform_indices = @transform_0, window_bounds = array<i64: 1, 16, 256>}, {pipeline_mode = #tpu.pipeline_mode<synchronous>, transform_indices = @transform_1, window_bounds = array<i64: 3, 16, 8>}, {pipeline_mode = #tpu.pipeline_mode<synchronous>, transform_indices = @transform_2, window_bounds = array<i64: 3, 1, 8>}, {transform_indices = @transform_3, window_bounds = array<i64: 1, 3, 256, 8>}]} {
    %c0 = arith.constant 0 : index
    %c0_0 = arith.constant 0 : index
    %c0_1 = arith.constant 0 : index
    %0 = vector.load %arg2[%c0, %c0_0, %c0_1] : memref<1x16x256xf32, #tpu.memory_space<vmem>>, vector<1x16x256xf32>
    %1 = vector.shape_cast %0 : vector<1x16x256xf32> to vector<16x256xf32>
    %2 = tpu.transpose %1, [1, 0] : vector<16x256xf32> -> vector<256x16xf32>
    %3 = arith.truncf %2 : vector<256x16xf32> to vector<256x16xbf16>
    %c0_2 = arith.constant 0 : index
    %c0_3 = arith.constant 0 : index
    %c0_4 = arith.constant 0 : index
    %4 = vector.load %arg3[%c0_2, %c0_3, %c0_4] : memref<3x16x8xbf16, #tpu.memory_space<vmem>>, vector<1x16x8xbf16>
    %5 = vector.shape_cast %4 : vector<1x16x8xbf16> to vector<16x8xbf16>
    %cst = arith.constant dense<0.000000e+00> : vector<256x8xf32>
    %6 = tpu.matmul %3, %5, %cst {dimension_numbers = #tpu.dot_dimension_numbers<[1], [0], [0], [1], [0, 0, 1, 1], [], []>} : vector<256x16xbf16>, vector<16x8xbf16>, vector<256x8xf32> -> vector<256x8xf32>
    %c0_5 = arith.constant 0 : index
    %c0_6 = arith.constant 0 : index
    %c0_7 = arith.constant 0 : index
    %7 = vector.load %arg4[%c0_5, %c0_6, %c0_7] : memref<3x1x8xf32, #tpu.memory_space<vmem>>, vector<1x1x8xf32>
    %8 = vector.shape_cast %7 : vector<1x1x8xf32> to vector<1x8xf32>
    %9 = vector.broadcast %8 : vector<1x8xf32> to vector<256x8xf32>
    %10 = arith.addf %6, %9 : vector<256x8xf32>
    %c0_8 = arith.constant 0 : index
    %c0_9 = arith.constant 0 : index
    %c0_10 = arith.constant 0 : index
    %c0_11 = arith.constant 0 : index
    %11 = vector.load %arg5[%c0_8, %c0_9, %c0_10, %c0_11] : memref<1x3x256x8xf32, #tpu.memory_space<vmem>>, vector<1x1x256x8xf32>
    %12 = vector.shape_cast %11 : vector<1x1x256x8xf32> to vector<256x8xf32>
    %13 = vector.shape_cast %10 : vector<256x8xf32> to vector<1x1x256x8xf32>
    tpu.vector_store %arg5[%c0_8, %c0_9, %c0_10, %c0_11], %13 {strides = array<i32>} : memref<1x3x256x8xf32, #tpu.memory_space<vmem>>, vector<1x1x256x8xf32>,
    %c1 = arith.constant 1 : index
    %c0_12 = arith.constant 0 : index
    %c0_13 = arith.constant 0 : index
    %14 = vector.load %arg3[%c1, %c0_12, %c0_13] : memref<3x16x8xbf16, #tpu.memory_space<vmem>>, vector<1x16x8xbf16>
    %15 = vector.shape_cast %14 : vector<1x16x8xbf16> to vector<16x8xbf16>
    %cst_14 = arith.constant dense<0.000000e+00> : vector<256x8xf32>
    %16 = tpu.matmul %3, %15, %cst_14 {dimension_numbers = #tpu.dot_dimension_numbers<[1], [0], [0], [1], [0, 0, 1, 1], [], []>} : vector<256x16xbf16>, vector<16x8xbf16>, vector<256x8xf32> -> vector<256x8xf32>
    %c1_15 = arith.constant 1 : index
    %c0_16 = arith.constant 0 : index
    %c0_17 = arith.constant 0 : index
    %17 = vector.load %arg4[%c1_15, %c0_16, %c0_17] : memref<3x1x8xf32, #tpu.memory_space<vmem>>, vector<1x1x8xf32>
    %18 = vector.shape_cast %17 : vector<1x1x8xf32> to vector<1x8xf32>
    %19 = vector.broadcast %18 : vector<1x8xf32> to vector<256x8xf32>
    %20 = arith.addf %16, %19 : vector<256x8xf32>
    %c0_18 = arith.constant 0 : index
    %c1_19 = arith.constant 1 : index
    %c0_20 = arith.constant 0 : index
    %c0_21 = arith.constant 0 : index
    %21 = vector.load %arg5[%c0_18, %c1_19, %c0_20, %c0_21] : memref<1x3x256x8xf32, #tpu.memory_space<vmem>>, vector<1x1x256x8xf32>
    %22 = vector.shape_cast %21 : vector<1x1x256x8xf32> to vector<256x8xf32>
    %23 = vector.shape_cast %20 : vector<256x8xf32> to vector<1x1x256x8xf32>
    tpu.vector_store %arg5[%c0_18, %c1_19, %c0_20, %c0_21], %23 {strides = array<i32>} : memref<1x3x256x8xf32, #tpu.memory_space<vmem>>, vector<1x1x256x8xf32>,
    %c2 = arith.constant 2 : index
    %c0_22 = arith.constant 0 : index
    %c0_23 = arith.constant 0 : index
    %24 = vector.load %arg3[%c2, %c0_22, %c0_23] : memref<3x16x8xbf16, #tpu.memory_space<vmem>>, vector<1x16x8xbf16>
    %25 = vector.shape_cast %24 : vector<1x16x8xbf16> to vector<16x8xbf16>
    %cst_24 = arith.constant dense<0.000000e+00> : vector<256x8xf32>
    %26 = tpu.matmul %3, %25, %cst_24 {dimension_numbers = #tpu.dot_dimension_numbers<[1], [0], [0], [1], [0, 0, 1, 1], [], []>} : vector<256x16xbf16>, vector<16x8xbf16>, vector<256x8xf32> -> vector<256x8xf32>
    %c2_25 = arith.constant 2 : index
    %c0_26 = arith.constant 0 : index
    %c0_27 = arith.constant 0 : index
    %27 = vector.load %arg4[%c2_25, %c0_26, %c0_27] : memref<3x1x8xf32, #tpu.memory_space<vmem>>, vector<1x1x8xf32>
    %28 = vector.shape_cast %27 : vector<1x1x8xf32> to vector<1x8xf32>
    %29 = vector.broadcast %28 : vector<1x8xf32> to vector<256x8xf32>
    %30 = arith.addf %26, %29 : vector<256x8xf32>
    %c0_28 = arith.constant 0 : index
    %c2_29 = arith.constant 2 : index
    %c0_30 = arith.constant 0 : index
    %c0_31 = arith.constant 0 : index
    %31 = vector.load %arg5[%c0_28, %c2_29, %c0_30, %c0_31] : memref<1x3x256x8xf32, #tpu.memory_space<vmem>>, vector<1x1x256x8xf32>
    %32 = vector.shape_cast %31 : vector<1x1x256x8xf32> to vector<256x8xf32>
    %33 = vector.shape_cast %30 : vector<256x8xf32> to vector<1x1x256x8xf32>
    tpu.vector_store %arg5[%c0_28, %c2_29, %c0_30, %c0_31], %33 {strides = array<i32>} : memref<1x3x256x8xf32, #tpu.memory_space<vmem>>, vector<1x1x256x8xf32>,
    return
  }
  func.func @transform_0(%arg0: i32, %arg1: i32) -> (i32, i32, i32) {
    %c0_i32 = arith.constant 0 : i32
    %c0_i32_0 = arith.constant 0 : i32
    return %arg1, %c0_i32, %arg0 : i32, i32, i32
  }
  func.func @transform_1(%arg0: i32, %arg1: i32) -> (i32, i32, i32) {
    %c0_i32 = arith.constant 0 : i32
    %c0_i32_0 = arith.constant 0 : i32
    %c0_i32_1 = arith.constant 0 : i32
    %c0_i32_2 = arith.constant 0 : i32
    return %c0_i32, %c0_i32_0, %c0_i32_1 : i32, i32, i32
  }
  func.func @transform_2(%arg0: i32, %arg1: i32) -> (i32, i32, i32) {
    %c0_i32 = arith.constant 0 : i32
    %c0_i32_0 = arith.constant 0 : i32
    %c0_i32_1 = arith.constant 0 : i32
    %c0_i32_2 = arith.constant 0 : i32
    return %c0_i32, %c0_i32_0, %c0_i32_1 : i32, i32, i32
  }
  func.func @transform_3(%arg0: i32, %arg1: i32) -> (i32, i32, i32, i32) {
    %c0_i32 = arith.constant 0 : i32
    %c0_i32_0 = arith.constant 0 : i32
    %c0_i32_1 = arith.constant 0 : i32
    return %arg1, %c0_i32, %arg0, %c0_i32_0 : i32, i32, i32, i32
  }
}

</mosaic_0001>

<llo_original>
// kernel: _detect_level.1
$region0: #{_detect_level.1}
  #allocation0 [shape = 'u32[]', space=smem, size = 0x4, offset = 0x4, fixed_abs, tag = 'smem constant byte address 0x4 - core index']
  #allocation1 [shape = 'u32[144,128]{1,0:T(1,128)}', space=vmem, size = 0x12000, scoped, tag = 'internal scratch']
  %s0 = inlined_call_operand.vmem [shape: f32[2,16,256], index: 0, kind: input, shape index: {}]
  %s1 = inlined_call_operand.vmem [shape: bf16[3,16,8], index: 1, kind: input, shape index: {}]
  %s2 = inlined_call_operand.vmem [shape: f32[3,1,8], index: 2, kind: input, shape index: {}]
  %s3 = inlined_call_operand.vmem [shape: f32[2,3,256,8], index: 3, kind: output, shape index: {}]
  %s4 = sld [smem:[#allocation0]]
  $region45: #{_detect_level.1} parent=0
    _
  %s6 = ssub.s32 1, %s4
  %s7 = scalar_select 0, %s6, %s4
  loop: start=0, step=1, limit=4
  $region2: #{_detect_level.1} parent=0 // loop_pre_header
    _
  $region3: #{_detect_level.1} parent=0 // loop_header
    %s9 = sphi 0, %s13
    %p10 = scmp.ge.s32.totalorder %s9, 4
    %s16 = sphi 0, %s28
    %s17 = sphi 0, %s24
    %s18 = sphi 0, %s16
    %s19 = sphi 0, %s17
    %s20 = sphi 0, %s18
    %s21 = sphi 0, %s19
    %s33 = sphi 0, %s35
    %s36 = sphi 0, %s33
    %s37 = sphi 0, %s36
    %s53 = sphi 0, %s37
    %s57 = sphi 0, %s57
    %s59 = sphi 0, %s57
    %s60 = sphi 0, %s59
    %s74 = sphi 0, %s60
    %s78 = sphi 0, %s78
    %s80 = sphi 0, %s78
    %s81 = sphi 0, %s80
    %s95 = sphi 0, %s81
    %s103 = sphi 0, %s105
    %s106 = sphi 0, %s103
    %s107 = sphi 0, %s106
    %s123 = sphi 0, %s107
  $region4: #{_detect_level.1} parent=0 // loop_header_branch
    %12 = sbr.rel (%p10) target = $region8
  $region5: #{_detect_level.1} parent=0 // loop_body
    %s14 = ssub.s32 %s9, 1
    %s15 = ssub.s32 %s9, 2
    %s22 = sadd.s32 1, %s17
    %p23 = scmp.ge.s32.totalorder %s22, 2
    %s24 = scalar_select %p23, 0, %s22
    %s25 = sadd.s32 1, %s16
    %s26 = scalar_select %p23, %s25, %s16
    %p27 = scmp.ge.s32.totalorder %s26, 1
    %s28 = scalar_select %p27, 0, %s26
    %s29 = ssub.s32 %s17, %s24
    %s30 = ssub.s32 %s16, %s28
    %s31 = sor.u32 %s29, %s30
    %p32 = scmp.eq.s32.totalorder %s31, 0
    %s34 = sadd.s32 %s33, 1
    %s35 = scalar_select %p32, %s33, %s34
    %p38 = pneg %p32
    %p39 = scmp.eq.s32.totalorder %s9, 1
    %p40 = por %p38, %p39
    %p41 = scmp.ne.s32.totalorder %s33, %s36
    %p42 = scmp.eq.s32.totalorder %s9, 0
    %p43 = por %p41, %p42
    %p44 = scmp.ne.s32.totalorder %s33, %s36
    %p45 = scmp.eq.s32.totalorder %s14, 1
    %p46 = por %p44, %p45
    %p47 = scmp.ne.s32.totalorder %s36, %s37
    %p48 = scmp.eq.s32.totalorder %s14, 0
    %p49 = por %p47, %p48
    %p50 = scmp.ne.s32.totalorder %s36, %s37
    %p51 = scmp.eq.s32.totalorder %s15, 1
    %p52 = por %p50, %p51
    %p54 = scmp.ne.s32.totalorder %s37, %s53
    %p55 = scmp.eq.s32.totalorder %s15, 0
    %p56 = por %p54, %p55
    %s58 = sadd.s32 %s57, 1
    %p61 = scmp.eq.s32.totalorder %s9, 1
    %p62 = scmp.ne.s32.totalorder %s57, %s59
    %p63 = scmp.eq.s32.totalorder %s9, 0
    %p64 = por %p62, %p63
    %p65 = scmp.ne.s32.totalorder %s57, %s59
    %p66 = scmp.eq.s32.totalorder %s14, 1
    %p67 = por %p65, %p66
    %p68 = scmp.ne.s32.totalorder %s59, %s60
    %p69 = scmp.eq.s32.totalorder %s14, 0
    %p70 = por %p68, %p69
    %p71 = scmp.ne.s32.totalorder %s59, %s60
    %p72 = scmp.eq.s32.totalorder %s15, 1
    %p73 = por %p71, %p72
    %p75 = scmp.ne.s32.totalorder %s60, %s74
    %p76 = scmp.eq.s32.totalorder %s15, 0
    %p77 = por %p75, %p76
    %s79 = sadd.s32 %s78, 1
    %p82 = scmp.eq.s32.totalorder %s9, 1
    %p83 = scmp.ne.s32.totalorder %s78, %s80
    %p84 = scmp.eq.s32.totalorder %s9, 0
    %p85 = por %p83, %p84
    %p86 = scmp.ne.s32.totalorder %s78, %s80
    %p87 = scmp.eq.s32.totalorder %s14, 1
    %p88 = por %p86, %p87
    %p89 = scmp.ne.s32.totalorder %s80, %s81
    %p90 = scmp.eq.s32.totalorder %s14, 0
    %p91 = por %p89, %p90
    %p92 = scmp.ne.s32.totalorder %s80, %s81
    %p93 = scmp.eq.s32.totalorder %s15, 1
    %p94 = por %p92, %p93
    %p96 = scmp.ne.s32.totalorder %s81, %s95
    %p97 = scmp.eq.s32.totalorder %s15, 0
    %p98 = por %p96, %p97
    %s99 = ssub.s32 %s17, %s24
    %s100 = ssub.s32 %s16, %s28
    %s101 = sor.u32 %s99, %s100
    %p102 = scmp.eq.s32.totalorder %s101, 0
    %s104 = sadd.s32 %s103, 1
    %s105 = scalar_select %p102, %s103, %s104
    %p108 = pneg %p102
    %p109 = scmp.eq.s32.totalorder %s9, 1
    %p110 = por %p108, %p109
    %p111 = scmp.ne.s32.totalorder %s103, %s106
    %p112 = scmp.eq.s32.totalorder %s9, 0
    %p113 = por %p111, %p112
    %p114 = scmp.ne.s32.totalorder %s103, %s106
    %p115 = scmp.eq.s32.totalorder %s14, 1
    %p116 = por %p114, %p115
    %p117 = scmp.ne.s32.totalorder %s106, %s107
    %p118 = scmp.eq.s32.totalorder %s14, 0
    %p119 = por %p117, %p118
    %p120 = scmp.ne.s32.totalorder %s106, %s107
    %p121 = scmp.eq.s32.totalorder %s15, 1
    %p122 = por %p120, %p121
    %p124 = scmp.ne.s32.totalorder %s107, %s123
    %p125 = scmp.eq.s32.totalorder %s15, 0
    %p126 = por %p124, %p125
    %p127 = scmp.le.s32.totalorder 1, %s9
    %p128 = scmp.lt.s32.totalorder %s9, 3
    %p129 = pnand %p127, %p128
    %p130 = pneg %p129
    // Predicated region
    $region9: #{_detect_level.1} parent=5 // pred_check
      _
    $region10: #{_detect_level.1} parent=5 // pred_check_branch
      %132 = sbr.rel (%p129) target = $region12
    $region11: #{_detect_level.1} parent=5 // pred_region
      %s133 = ssub.s32 %s9, 1
      // Predicated region
      $region13: #{_detect_level.1} parent=11 // pred_check
        %p134 = pneg %p70
      $region14: #{_detect_level.1} parent=11 // pred_check_branch
        %136 = sbr.rel (%p134) target = $region16
      $region15: #{_detect_level.1} parent=11 // pred_region
        _
      $region16: #{_detect_level.1} parent=11 // pred_fallthru
        _
      // Predicated region
      $region17: #{_detect_level.1} parent=11 // pred_check
        %p137 = pneg %p91
      $region18: #{_detect_level.1} parent=11 // pred_check_branch
        %139 = sbr.rel (%p137) target = $region20
      $region19: #{_detect_level.1} parent=11 // pred_region
        _
      $region20: #{_detect_level.1} parent=11 // pred_fallthru
        _
    $region12: #{_detect_level.1} parent=5 // pred_fallthru
      _
    %p140 = scmp.lt.s32.totalorder %s9, 2
    // Predicated region
    $region21: #{_detect_level.1} parent=5 // pred_check
      %p141 = pneg %p140
    $region22: #{_detect_level.1} parent=5 // pred_check_branch
      %143 = sbr.rel (%p141) target = $region24
    $region23: #{_detect_level.1} parent=5 // pred_region
      // Predicated region
      $region25: #{_detect_level.1} parent=23 // pred_check
        %p144 = pneg %p43
      $region26: #{_detect_level.1} parent=23 // pred_check_branch
        %146 = sbr.rel (%p144) target = $region28
      $region27: #{_detect_level.1} parent=23 // pred_region
        %s147 = smul.u32 2, %s16
        %p148 = scmp.lt.s32.totalorder %s17, 1
        %s149 = scalar_select %p148, %s17, 1
        %p150 = scmp.lt.s32.totalorder %s147, 1
        %s151 = scalar_select %p150, %s147, 1
        %s152 = smul.addr %s149, 4
        %s153 = sadd.s32 %s151, %s152
        %s154 = smul.addr %s153, 8
        %s155 = scalar_lea.vmem %s0, %s154
        %s156 = smul.u32 2, %s16
      $region28: #{_detect_level.1} parent=23 // pred_fallthru
        _
    $region24: #{_detect_level.1} parent=5 // pred_fallthru
      _
    %p157 = scmp.le.s32.totalorder 1, %s9
    %p158 = scmp.lt.s32.totalorder %s9, 3
    %p159 = pnand %p157, %p158
    %p160 = pneg %p159
    // Predicated region
    $region29: #{_detect_level.1} parent=5 // pred_check
      _
    $region30: #{_detect_level.1} parent=5 // pred_check_branch
      %162 = sbr.rel (%p159) target = $region32
    $region31: #{_detect_level.1} parent=5 // pred_region
      %s163 = ssub.s32 %s9, 1
      %s164 = smul.u32 2, %s18
      %p165 = scmp.lt.s32.totalorder %s19, 1
      %s166 = scalar_select %p165, %s19, 1
      %p167 = scmp.lt.s32.totalorder %s164, 1
      %s168 = scalar_select %p167, %s164, 1
      %s169 = smul.addr %s166, 4
      %s170 = sadd.s32 %s168, %s169
      %s171 = smul.addr %s170, 8
      %s172 = scalar_lea.vmem %s0, %s171
      %p173 = pneg %p49
      %p174 = pneg %p46
      %p175 = pneg %p70
      %p176 = pneg %p67
      %p177 = pneg %p91
      %p178 = pneg %p88
      %p179 = pneg %p119
      %p180 = pneg %p116
      %s181 = smul.u32 32, %s18
      %p182 = scmp.lt.s32.totalorder %s19, 1
      %s183 = scalar_select %p182, %s19, 1
      %p184 = scmp.lt.s32.totalorder %s181, 31
      %s185 = scalar_select %p184, %s181, 31
      %s186 = smul.addr %s183, 96
      %s187 = sadd.s32 %s185, %s186
      %s188 = smul.addr %s187, 8
      %s189 = scalar_lea.vmem %s3, %s188
      %s190 = smul.u32 2, %s18
      %p191 = scmp.lt.s32.totalorder %s19, 1
      %s192 = scalar_select %p191, %s19, 1
      %p193 = scmp.lt.s32.totalorder %s190, 1
      %s194 = scalar_select %p193, %s190, 1
      %s195 = smul.addr %s192, 4
      %s196 = sadd.s32 %s194, %s195
      %s197 = smul.addr %s196, 8
      %s198 = scalar_lea.vmem %s0, %s197
      %s199 = smul.u32 2, %s18
      %s200 = smul.u32 32, %s18
      %p201 = scmp.lt.s32.totalorder %s19, 1
      %s202 = scalar_select %p201, %s19, 1
      %p203 = scmp.lt.s32.totalorder %s200, 31
      %s204 = scalar_select %p203, %s200, 31
      %s205 = smul.addr %s202, 96
      %s206 = sadd.s32 %s204, %s205
      %s207 = smul.addr %s206, 8
      %s208 = scalar_lea.vmem %s3, %s207
      %s209 = smul.u32 32, %s18
      %v211 = vld [vmem:[%s198] sm:$0xff]
      %v212 = vld [vmem:[%s198 + $0x8] sm:$0xff]
      %v213 = vld [vmem:[%s198 + $0x10] sm:$0xff]
      %v214 = vld [vmem:[%s198 + $0x18] sm:$0xff]
      %215 = vxpose.xlu0.b32.start [1/16] %v211, 128
      %216 = vxpose.xlu0.b32.cont [2/16] %v213, 128
      %217 = vxpose.xlu0.b32.cont [3/16] 0.0, 128
      %218 = vxpose.xlu0.b32.cont [4/16] 0.0, 128
      %219 = vxpose.xlu0.b32.cont [5/16] 0.0, 128
      %220 = vxpose.xlu0.b32.cont [6/16] 0.0, 128
      %221 = vxpose.xlu0.b32.cont [7/16] 0.0, 128
      %222 = vxpose.xlu0.b32.cont [8/16] 0.0, 128
      %223 = vxpose.xlu0.b32.cont [9/16] 0.0, 128
      %224 = vxpose.xlu0.b32.cont [10/16] 0.0, 128
      %225 = vxpose.xlu0.b32.cont [11/16] 0.0, 128
      %226 = vxpose.xlu0.b32.cont [12/16] 0.0, 128
      %227 = vxpose.xlu0.b32.cont [13/16] 0.0, 128
      %228 = vxpose.xlu0.b32.cont [14/16] 0.0, 128
      %229 = vxpose.xlu0.b32.cont [15/16] 0.0, 128
      %230 = vxpose.xlu0.b32.end [16/16] 0.0, 128
      %v231 = vpop.trf.xlu0
      %v232 = vpop.trf.xlu0
      %v233 = vpop.trf.xlu0
      %v234 = vpop.trf.xlu0
      %v235 = vpop.trf.xlu0
      %v236 = vpop.trf.xlu0
      %v237 = vpop.trf.xlu0
      %v238 = vpop.trf.xlu0
      %v239 = vpop.trf.xlu0
      %v240 = vpop.trf.xlu0
      %v241 = vpop.trf.xlu0
      %v242 = vpop.trf.xlu0
      %v243 = vpop.trf.xlu0
      %v244 = vpop.trf.xlu0
      %v245 = vpop.trf.xlu0
      %v246 = vpop.trf.xlu0
      %247 = vxpose.xlu0.b32.start [1/16] %v212, 128
      %248 = vxpose.xlu0.b32.cont [2/16] %v214, 128
      %249 = vxpose.xlu0.b32.cont [3/16] 0.0, 128
      %250 = vxpose.xlu0.b32.cont [4/16] 0.0, 128
      %251 = vxpose.xlu0.b32.cont [5/16] 0.0, 128
      %252 = vxpose.xlu0.b32.cont [6/16] 0.0, 128
      %253 = vxpose.xlu0.b32.cont [7/16] 0.0, 128
      %254 = vxpose.xlu0.b32.cont [8/16] 0.0, 128
      %255 = vxpose.xlu0.b32.cont [9/16] 0.0, 128
      %256 = vxpose.xlu0.b32.cont [10/16] 0.0, 128
      %257 = vxpose.xlu0.b32.cont [11/16] 0.0, 128
      %258 = vxpose.xlu0.b32.cont [12/16] 0.0, 128
      %259 = vxpose.xlu0.b32.cont [13/16] 0.0, 128
      %260 = vxpose.xlu0.b32.cont [14/16] 0.0, 128
      %261 = vxpose.xlu0.b32.cont [15/16] 0.0, 128
      %262 = vxpose.xlu0.b32.end [16/16] 0.0, 128
      %v263 = vpop.trf.xlu0
      %v264 = vpop.trf.xlu0
      %v265 = vpop.trf.xlu0
      %v266 = vpop.trf.xlu0
      %v267 = vpop.trf.xlu0
      %v268 = vpop.trf.xlu0
      %v269 = vpop.trf.xlu0
      %v270 = vpop.trf.xlu0
      %v271 = vpop.trf.xlu0
      %v272 = vpop.trf.xlu0
      %v273 = vpop.trf.xlu0
      %v274 = vpop.trf.xlu0
      %v275 = vpop.trf.xlu0
      %v276 = vpop.trf.xlu0
      %v277 = vpop.trf.xlu0
      %v278 = vpop.trf.xlu0
      %v279 = vpack.c.bf16 %v232, %v231
      %v280 = vpack.c.bf16 %v234, %v233
      %v281 = vpack.c.bf16 %v236, %v235
      %v282 = vpack.c.bf16 %v238, %v237
      %v283 = vpack.c.bf16 %v240, %v239
      %v284 = vpack.c.bf16 %v242, %v241
      %v285 = vpack.c.bf16 %v244, %v243
      %v286 = vpack.c.bf16 %v246, %v245
      %v287 = vpack.c.bf16 %v264, %v263
      %v288 = vpack.c.bf16 %v266, %v265
      %v289 = vpack.c.bf16 %v268, %v267
      %v290 = vpack.c.bf16 %v270, %v269
      %v291 = vpack.c.bf16 %v272, %v271
      %v292 = vpack.c.bf16 %v274, %v273
      %v293 = vpack.c.bf16 %v276, %v275
      %v294 = vpack.c.bf16 %v278, %v277
      %v295 = vld [vmem:[%s1] sm:$0xf]
      %v296 = vld [vmem:[%s1 + $0x4] sm:$0xf]
      %v297 = vld [vmem:[%s2] sm:$0x1]
      %v299 = vlaneseq
      %v300 = vshrl.u32 %v299, 7
      %v301 = vsub.s32 0, %v300
      %v302 = vrot.slane %v297, %v301
      %v306 = vunpack.c.l.b16 %v295
      %v307 = vunpack.c.l.b16 %v296
      %v308 = vpack.c.b16 %v307, %v306
      %vm310 = vcmask 130048
      %v312 = vsel %vm310, %v279, 0
      %v315 = vsel %vm310, %v280, 0
      %v318 = vsel %vm310, %v281, 0
      %v321 = vsel %vm310, %v282, 0
      %v324 = vsel %vm310, %v283, 0
      %v327 = vsel %vm310, %v284, 0
      %v330 = vsel %vm310, %v285, 0
      %v333 = vsel %vm310, %v286, 0
      %v336 = vsel %vm310, %v287, 0
      %v339 = vsel %vm310, %v288, 0
      %v342 = vsel %vm310, %v289, 0
      %v345 = vsel %vm310, %v290, 0
      %v348 = vsel %vm310, %v291, 0
      %v351 = vsel %vm310, %v292, 0
      %v354 = vsel %vm310, %v293, 0
      %v357 = vsel %vm310, %v294, 0
      %359 = vmatprep.subr.bf16.mxu0 0
      %360 = vmatpush1.bf16.msra.mxu0 %v308
      %361 = vmatprep.subr.bf16.mxu0 0
      %362 = vmatpush1.bf16.msra.mxu0 0
      %363 = vmatprep.subr.bf16.mxu0 0
      %364 = vmatpush1.bf16.msra.mxu0 0
      %365 = vmatprep.subr.bf16.mxu0 0
      %366 = vmatpush1.bf16.msra.mxu0 0
      %367 = vmatprep.subr.bf16.mxu0 0
      %368 = vmatpush1.bf16.msra.mxu0 0
      %369 = vmatprep.subr.bf16.mxu0 0
      %370 = vmatpush1.bf16.msra.mxu0 0
      %371 = vmatprep.subr.bf16.mxu0 0
      %372 = vmatpush1.bf16.msra.mxu0 0
      %373 = vmatprep.subr.bf16.mxu0 0
      %374 = vmatpush1.bf16.msra.mxu0 0
      %375 = vmatprep.subr.bf16.mxu0 0
      %376 = vmatpush1.bf16.msra.mxu0 0
      %377 = vmatprep.subr.bf16.mxu0 0
      %378 = vmatpush1.bf16.msra.mxu0 0
      %379 = vmatprep.subr.bf16.mxu0 0
      %380 = vmatpush1.bf16.msra.mxu0 0
      %381 = vmatprep.subr.bf16.mxu0 0
      %382 = vmatpush1.bf16.msra.mxu0 0
      %383 = vmatprep.subr.bf16.mxu0 0
      %384 = vmatpush1.bf16.msra.mxu0 0
      %385 = vmatprep.subr.bf16.mxu0 0
      %386 = vmatpush1.bf16.msra.mxu0 0
      %387 = vmatprep.subr.bf16.mxu0 0
      %388 = vmatpush1.bf16.msra.mxu0 0
      %389 = vmatprep.subr.bf16.mxu0 0
      %390 = vmatpush1.bf16.msra.mxu0 0
      %391 = vmatprep.mubr.bf16.mxu0 0
      %392 = vmatmul.mubr.bf16.gmra.mrb[0].mxu0 %v312
      %v393 = vpop.f32.mrb[0].mxu0
      %v394 = vadd.f32 %v302, %v393
      %v395 = vpop.f32.mrb[0].mxu0
      %v396 = vpop.f32.mrb[0].mxu0
      %v397 = vadd.f32 %v302, %v396
      %v398 = vpop.f32.mrb[0].mxu0
      %399 = vmatprep.mubr.bf16.mxu0 0
      %400 = vmatmul.mubr.bf16.gmra.mrb[0].mxu0 %v315
      %v401 = vpop.f32.mrb[0].mxu0
      %v402 = vadd.f32 %v302, %v401
      %v403 = vpop.f32.mrb[0].mxu0
      %v404 = vpop.f32.mrb[0].mxu0
      %v405 = vadd.f32 %v302, %v404
      %v406 = vpop.f32.mrb[0].mxu0
      %407 = vmatprep.mubr.bf16.mxu0 0
      %408 = vmatmul.mubr.bf16.gmra.mrb[0].mxu0 %v318
      %v409 = vpop.f32.mrb[0].mxu0
      %v410 = vadd.f32 %v302, %v409
      %v411 = vpop.f32.mrb[0].mxu0
      %v412 = vpop.f32.mrb[0].mxu0
      %v413 = vadd.f32 %v302, %v412
      %v414 = vpop.f32.mrb[0].mxu0
      %415 = vmatprep.mubr.bf16.mxu0 0
      %416 = vmatmul.mubr.bf16.gmra.mrb[0].mxu0 %v321
      %v417 = vpop.f32.mrb[0].mxu0
      %v418 = vadd.f32 %v302, %v417
      %v419 = vpop.f32.mrb[0].mxu0
      %v420 = vpop.f32.mrb[0].mxu0
      %v421 = vadd.f32 %v302, %v420
      %v422 = vpop.f32.mrb[0].mxu0
      %423 = vmatprep.mubr.bf16.mxu0 0
      %424 = vmatmul.mubr.bf16.gmra.mrb[0].mxu0 %v324
      %v425 = vpop.f32.mrb[0].mxu0
      %v426 = vadd.f32 %v302, %v425
      %v427 = vpop.f32.mrb[0].mxu0
      %v428 = vpop.f32.mrb[0].mxu0
      %v429 = vadd.f32 %v302, %v428
      %v430 = vpop.f32.mrb[0].mxu0
      %431 = vmatprep.mubr.bf16.mxu0 0
      %432 = vmatmul.mubr.bf16.gmra.mrb[0].mxu0 %v327
      %v433 = vpop.f32.mrb[0].mxu0
      %v434 = vadd.f32 %v302, %v433
      %v435 = vpop.f32.mrb[0].mxu0
      %v436 = vpop.f32.mrb[0].mxu0
      %v437 = vadd.f32 %v302, %v436
      %v438 = vpop.f32.mrb[0].mxu0
      %439 = vmatprep.mubr.bf16.mxu0 0
      %440 = vmatmul.mubr.bf16.gmra.mrb[0].mxu0 %v330
      %v441 = vpop.f32.mrb[0].mxu0
      %v442 = vadd.f32 %v302, %v441
      %v443 = vpop.f32.mrb[0].mxu0
      %v444 = vpop.f32.mrb[0].mxu0
      %v445 = vadd.f32 %v302, %v444
      %v446 = vpop.f32.mrb[0].mxu0
      %447 = vmatprep.mubr.bf16.mxu0 0
      %448 = vmatmul.mubr.bf16.gmra.mrb[0].mxu0 %v333
      %v449 = vpop.f32.mrb[0].mxu0
      %v450 = vadd.f32 %v302, %v449
      %v451 = vpop.f32.mrb[0].mxu0
      %v452 = vpop.f32.mrb[0].mxu0
      %v453 = vadd.f32 %v302, %v452
      %v454 = vpop.f32.mrb[0].mxu0
      %455 = vmatprep.mubr.bf16.mxu0 0
      %456 = vmatmul.mubr.bf16.gmra.mrb[0].mxu0 %v336
      %v457 = vpop.f32.mrb[0].mxu0
      %v458 = vadd.f32 %v302, %v457
      %v459 = vpop.f32.mrb[0].mxu0
      %v460 = vpop.f32.mrb[0].mxu0
      %v461 = vadd.f32 %v302, %v460
      %v462 = vpop.f32.mrb[0].mxu0
      %463 = vmatprep.mubr.bf16.mxu0 0
      %464 = vmatmul.mubr.bf16.gmra.mrb[0].mxu0 %v339
      %v465 = vpop.f32.mrb[0].mxu0
      %v466 = vadd.f32 %v302, %v465
      %v467 = vpop.f32.mrb[0].mxu0
      %v468 = vpop.f32.mrb[0].mxu0
      %v469 = vadd.f32 %v302, %v468
      %v470 = vpop.f32.mrb[0].mxu0
      %471 = vmatprep.mubr.bf16.mxu0 0
      %472 = vmatmul.mubr.bf16.gmra.mrb[0].mxu0 %v342
      %v473 = vpop.f32.mrb[0].mxu0
      %v474 = vadd.f32 %v302, %v473
      %v475 = vpop.f32.mrb[0].mxu0
      %v476 = vpop.f32.mrb[0].mxu0
      %v477 = vadd.f32 %v302, %v476
      %v478 = vpop.f32.mrb[0].mxu0
      %479 = vmatprep.mubr.bf16.mxu0 0
      %480 = vmatmul.mubr.bf16.gmra.mrb[0].mxu0 %v345
      %v481 = vpop.f32.mrb[0].mxu0
      %v482 = vadd.f32 %v302, %v481
      %v483 = vpop.f32.mrb[0].mxu0
      %v484 = vpop.f32.mrb[0].mxu0
      %v485 = vadd.f32 %v302, %v484
      %v486 = vpop.f32.mrb[0].mxu0
      %487 = vmatprep.mubr.bf16.mxu0 0
      %488 = vmatmul.mubr.bf16.gmra.mrb[0].mxu0 %v348
      %v489 = vpop.f32.mrb[0].mxu0
      %v490 = vadd.f32 %v302, %v489
      %v491 = vpop.f32.mrb[0].mxu0
      %v492 = vpop.f32.mrb[0].mxu0
      %v493 = vadd.f32 %v302, %v492
      %v494 = vpop.f32.mrb[0].mxu0
      %495 = vmatprep.mubr.bf16.mxu0 0
      %496 = vmatmul.mubr.bf16.gmra.mrb[0].mxu0 %v351
      %v497 = vpop.f32.mrb[0].mxu0
      %v498 = vadd.f32 %v302, %v497
      %v499 = vpop.f32.mrb[0].mxu0
      %v500 = vpop.f32.mrb[0].mxu0
      %v501 = vadd.f32 %v302, %v500
      %v502 = vpop.f32.mrb[0].mxu0
      %503 = vmatprep.mubr.bf16.mxu0 0
      %504 = vmatmul.mubr.bf16.gmra.mrb[0].mxu0 %v354
      %v505 = vpop.f32.mrb[0].mxu0
      %v506 = vadd.f32 %v302, %v505
      %v507 = vpop.f32.mrb[0].mxu0
      %v508 = vpop.f32.mrb[0].mxu0
      %v509 = vadd.f32 %v302, %v508
      %v510 = vpop.f32.mrb[0].mxu0
      %511 = vmatprep.mubr.bf16.mxu0 0
      %512 = vmatmul.mubr.bf16.gmra.mrb[0].mxu0 %v357
      %v513 = vpop.f32.mrb[0].mxu0
      %v514 = vadd.f32 %v302, %v513
      %v515 = vpop.f32.mrb[0].mxu0
      %v516 = vpop.f32.mrb[0].mxu0
      %v517 = vadd.f32 %v302, %v516
      %v518 = vpop.f32.mrb[0].mxu0
      %519 = vdwg.mxu0
      %vm520 = vcmask 64512
      %521 = vst.msk [vmem:[%s208] sm:$0xff] %vm520, %v394
      %522 = vst.msk [vmem:[%s208 + $0x8] sm:$0xff] %vm520, %v397
      %523 = vst.msk [vmem:[%s208 + $0x10] sm:$0xff] %vm520, %v402
      %524 = vst.msk [vmem:[%s208 + $0x18] sm:$0xff] %vm520, %v405
      %525 = vst.msk [vmem:[%s208 + $0x20] sm:$0xff] %vm520, %v410
      %526 = vst.msk [vmem:[%s208 + $0x28] sm:$0xff] %vm520, %v413
      %527 = vst.msk [vmem:[%s208 + $0x30] sm:$0xff] %vm520, %v418
      %528 = vst.msk [vmem:[%s208 + $0x38] sm:$0xff] %vm520, %v421
      %529 = vst.msk [vmem:[%s208 + $0x40] sm:$0xff] %vm520, %v426
      %530 = vst.msk [vmem:[%s208 + $0x48] sm:$0xff] %vm520, %v429
      %531 = vst.msk [vmem:[%s208 + $0x50] sm:$0xff] %vm520, %v434
      %532 = vst.msk [vmem:[%s208 + $0x58] sm:$0xff] %vm520, %v437
      %533 = vst.msk [vmem:[%s208 + $0x60] sm:$0xff] %vm520, %v442
      %534 = vst.msk [vmem:[%s208 + $0x68] sm:$0xff] %vm520, %v445
      %535 = vst.msk [vmem:[%s208 + $0x70] sm:$0xff] %vm520, %v450
      %536 = vst.msk [vmem:[%s208 + $0x78] sm:$0xff] %vm520, %v453
      %537 = vst.msk [vmem:[%s208 + $0x80] sm:$0xff] %vm520, %v458
      %538 = vst.msk [vmem:[%s208 + $0x88] sm:$0xff] %vm520, %v461
      %539 = vst.msk [vmem:[%s208 + $0x90] sm:$0xff] %vm520, %v466
      %540 = vst.msk [vmem:[%s208 + $0x98] sm:$0xff] %vm520, %v469
      %541 = vst.msk [vmem:[%s208 + $0xa0] sm:$0xff] %vm520, %v474
      %542 = vst.msk [vmem:[%s208 + $0xa8] sm:$0xff] %vm520, %v477
      %543 = vst.msk [vmem:[%s208 + $0xb0] sm:$0xff] %vm520, %v482
      %544 = vst.msk [vmem:[%s208 + $0xb8] sm:$0xff] %vm520, %v485
      %545 = vst.msk [vmem:[%s208 + $0xc0] sm:$0xff] %vm520, %v490
      %546 = vst.msk [vmem:[%s208 + $0xc8] sm:$0xff] %vm520, %v493
      %547 = vst.msk [vmem:[%s208 + $0xd0] sm:$0xff] %vm520, %v498
      %548 = vst.msk [vmem:[%s208 + $0xd8] sm:$0xff] %vm520, %v501
      %549 = vst.msk [vmem:[%s208 + $0xe0] sm:$0xff] %vm520, %v506
      %550 = vst.msk [vmem:[%s208 + $0xe8] sm:$0xff] %vm520, %v509
      %551 = vst.msk [vmem:[%s208 + $0xf0] sm:$0xff] %vm520, %v514
      %552 = vst.msk [vmem:[%s208 + $0xf8] sm:$0xff] %vm520, %v517
      %s553 = scalar_lea.vmem %s1, 8
      %v554 = vld [vmem:[%s553] sm:$0xf]
      %v555 = vld [vmem:[%s553 + $0x4] sm:$0xf]
      %s556 = scalar_lea.vmem %s2, 1
      %v557 = vld [vmem:[%s556] sm:$0x1]
      %v559 = vlaneseq
      %v560 = vshrl.u32 %v559, 7
      %v561 = vsub.s32 0, %v560
      %v562 = vrot.slane %v557, %v561
      %v566 = vunpack.c.l.b16 %v554
      %v567 = vunpack.c.l.b16 %v555
      %v568 = vpack.c.b16 %v567, %v566
      %570 = vmatprep.subr.bf16.mxu0 0
      %571 = vmatpush1.bf16.msra.mxu0 %v568
      %572 = vmatprep.subr.bf16.mxu0 0
      %573 = vmatpush1.bf16.msra.mxu0 0
      %574 = vmatprep.subr.bf16.mxu0 0
      %575 = vmatpush1.bf16.msra.mxu0 0
      %576 = vmatprep.subr.bf16.mxu0 0
      %577 = vmatpush1.bf16.msra.mxu0 0
      %578 = vmatprep.subr.bf16.mxu0 0
      %579 = vmatpush1.bf16.msra.mxu0 0
      %580 = vmatprep.subr.bf16.mxu0 0
      %581 = vmatpush1.bf16.msra.mxu0 0
      %582 = vmatprep.subr.bf16.mxu0 0
      %583 = vmatpush1.bf16.msra.mxu0 0
      %584 = vmatprep.subr.bf16.mxu0 0
      %585 = vmatpush1.bf16.msra.mxu0 0
      %586 = vmatprep.subr.bf16.mxu0 0
      %587 = vmatpush1.bf16.msra.mxu0 0
      %588 = vmatprep.subr.bf16.mxu0 0
      %589 = vmatpush1.bf16.msra.mxu0 0
      %590 = vmatprep.subr.bf16.mxu0 0
      %591 = vmatpush1.bf16.msra.mxu0 0
      %592 = vmatprep.subr.bf16.mxu0 0
      %593 = vmatpush1.bf16.msra.mxu0 0
      %594 = vmatprep.subr.bf16.mxu0 0
      %595 = vmatpush1.bf16.msra.mxu0 0
      %596 = vmatprep.subr.bf16.mxu0 0
      %597 = vmatpush1.bf16.msra.mxu0 0
      %598 = vmatprep.subr.bf16.mxu0 0
      %599 = vmatpush1.bf16.msra.mxu0 0
      %600 = vmatprep.subr.bf16.mxu0 0
      %601 = vmatpush1.bf16.msra.mxu0 0
      %602 = vmatprep.mubr.bf16.mxu0 0
      %603 = vmatmul.mubr.bf16.gmra.mrb[0].mxu0 %v312
      %v604 = vpop.f32.mrb[0].mxu0
      %v605 = vadd.f32 %v562, %v604
      %v606 = vpop.f32.mrb[0].mxu0
      %v607 = vpop.f32.mrb[0].mxu0
      %v608 = vadd.f32 %v562, %v607
      %v609 = vpop.f32.mrb[0].mxu0
      %610 = vmatprep.mubr.bf16.mxu0 0
      %611 = vmatmul.mubr.bf16.gmra.mrb[0].mxu0 %v315
      %v612 = vpop.f32.mrb[0].mxu0
      %v613 = vadd.f32 %v562, %v612
      %v614 = vpop.f32.mrb[0].mxu0
      %v615 = vpop.f32.mrb[0].mxu0
      %v616 = vadd.f32 %v562, %v615
      %v617 = vpop.f32.mrb[0].mxu0
      %618 = vmatprep.mubr.bf16.mxu0 0
      %619 = vmatmul.mubr.bf16.gmra.mrb[0].mxu0 %v318
      %v620 = vpop.f32.mrb[0].mxu0
      %v621 = vadd.f32 %v562, %v620
      %v622 = vpop.f32.mrb[0].mxu0
      %v623 = vpop.f32.mrb[0].mxu0
      %v624 = vadd.f32 %v562, %v623
      %v625 = vpop.f32.mrb[0].mxu0
      %626 = vmatprep.mubr.bf16.mxu0 0
      %627 = vmatmul.mubr.bf16.gmra.mrb[0].mxu0 %v321
      %v628 = vpop.f32.mrb[0].mxu0
      %v629 = vadd.f32 %v562, %v628
      %v630 = vpop.f32.mrb[0].mxu0
      %v631 = vpop.f32.mrb[0].mxu0
      %v632 = vadd.f32 %v562, %v631
      %v633 = vpop.f32.mrb[0].mxu0
      %634 = vmatprep.mubr.bf16.mxu0 0
      %635 = vmatmul.mubr.bf16.gmra.mrb[0].mxu0 %v324
      %v636 = vpop.f32.mrb[0].mxu0
      %v637 = vadd.f32 %v562, %v636
      %v638 = vpop.f32.mrb[0].mxu0
      %v639 = vpop.f32.mrb[0].mxu0
      %v640 = vadd.f32 %v562, %v639
      %v641 = vpop.f32.mrb[0].mxu0
      %642 = vmatprep.mubr.bf16.mxu0 0
      %643 = vmatmul.mubr.bf16.gmra.mrb[0].mxu0 %v327
      %v644 = vpop.f32.mrb[0].mxu0
      %v645 = vadd.f32 %v562, %v644
      %v646 = vpop.f32.mrb[0].mxu0
      %v647 = vpop.f32.mrb[0].mxu0
      %v648 = vadd.f32 %v562, %v647
      %v649 = vpop.f32.mrb[0].mxu0
      %650 = vmatprep.mubr.bf16.mxu0 0
      %651 = vmatmul.mubr.bf16.gmra.mrb[0].mxu0 %v330
      %v652 = vpop.f32.mrb[0].mxu0
      %v653 = vadd.f32 %v562, %v652
      %v654 = vpop.f32.mrb[0].mxu0
      %v655 = vpop.f32.mrb[0].mxu0
      %v656 = vadd.f32 %v562, %v655
      %v657 = vpop.f32.mrb[0].mxu0
      %658 = vmatprep.mubr.bf16.mxu0 0
      %659 = vmatmul.mubr.bf16.gmra.mrb[0].mxu0 %v333
      %v660 = vpop.f32.mrb[0].mxu0
      %v661 = vadd.f32 %v562, %v660
      %v662 = vpop.f32.mrb[0].mxu0
      %v663 = vpop.f32.mrb[0].mxu0
      %v664 = vadd.f32 %v562, %v663
      %v665 = vpop.f32.mrb[0].mxu0
      %666 = vmatprep.mubr.bf16.mxu0 0
      %667 = vmatmul.mubr.bf16.gmra.mrb[0].mxu0 %v336
      %v668 = vpop.f32.mrb[0].mxu0
      %v669 = vadd.f32 %v562, %v668
      %v670 = vpop.f32.mrb[0].mxu0
      %v671 = vpop.f32.mrb[0].mxu0
      %v672 = vadd.f32 %v562, %v671
      %v673 = vpop.f32.mrb[0].mxu0
      %674 = vmatprep.mubr.bf16.mxu0 0
      %675 = vmatmul.mubr.bf16.gmra.mrb[0].mxu0 %v339
      %v676 = vpop.f32.mrb[0].mxu0
      %v677 = vadd.f32 %v562, %v676
      %v678 = vpop.f32.mrb[0].mxu0
      %v679 = vpop.f32.mrb[0].mxu0
      %v680 = vadd.f32 %v562, %v679
      %v681 = vpop.f32.mrb[0].mxu0
      %682 = vmatprep.mubr.bf16.mxu0 0
      %683 = vmatmul.mubr.bf16.gmra.mrb[0].mxu0 %v342
      %v684 = vpop.f32.mrb[0].mxu0
      %v685 = vadd.f32 %v562, %v684
      %v686 = vpop.f32.mrb[0].mxu0
      %v687 = vpop.f32.mrb[0].mxu0
      %v688 = vadd.f32 %v562, %v687
      %v689 = vpop.f32.mrb[0].mxu0
      %690 = vmatprep.mubr.bf16.mxu0 0
      %691 = vmatmul.mubr.bf16.gmra.mrb[0].mxu0 %v345
      %v692 = vpop.f32.mrb[0].mxu0
      %v693 = vadd.f32 %v562, %v692
      %v694 = vpop.f32.mrb[0].mxu0
      %v695 = vpop.f32.mrb[0].mxu0
      %v696 = vadd.f32 %v562, %v695
      %v697 = vpop.f32.mrb[0].mxu0
      %698 = vmatprep.mubr.bf16.mxu0 0
      %699 = vmatmul.mubr.bf16.gmra.mrb[0].mxu0 %v348
      %v700 = vpop.f32.mrb[0].mxu0
      %v701 = vadd.f32 %v562, %v700
      %v702 = vpop.f32.mrb[0].mxu0
      %v703 = vpop.f32.mrb[0].mxu0
      %v704 = vadd.f32 %v562, %v703
      %v705 = vpop.f32.mrb[0].mxu0
      %706 = vmatprep.mubr.bf16.mxu0 0
      %707 = vmatmul.mubr.bf16.gmra.mrb[0].mxu0 %v351
      %v708 = vpop.f32.mrb[0].mxu0
      %v709 = vadd.f32 %v562, %v708
      %v710 = vpop.f32.mrb[0].mxu0
      %v711 = vpop.f32.mrb[0].mxu0
      %v712 = vadd.f32 %v562, %v711
      %v713 = vpop.f32.mrb[0].mxu0
      %714 = vmatprep.mubr.bf16.mxu0 0
      %715 = vmatmul.mubr.bf16.gmra.mrb[0].mxu0 %v354
      %v716 = vpop.f32.mrb[0].mxu0
      %v717 = vadd.f32 %v562, %v716
      %v718 = vpop.f32.mrb[0].mxu0
      %v719 = vpop.f32.mrb[0].mxu0
      %v720 = vadd.f32 %v562, %v719
      %v721 = vpop.f32.mrb[0].mxu0
      %722 = vmatprep.mubr.bf16.mxu0 0
      %723 = vmatmul.mubr.bf16.gmra.mrb[0].mxu0 %v357
      %v724 = vpop.f32.mrb[0].mxu0
      %v725 = vadd.f32 %v562, %v724
      %v726 = vpop.f32.mrb[0].mxu0
      %v727 = vpop.f32.mrb[0].mxu0
      %v728 = vadd.f32 %v562, %v727
      %v729 = vpop.f32.mrb[0].mxu0
      %730 = vdwg.mxu0
      %s731 = scalar_lea.vmem %s208, 256
      %732 = vst.msk [vmem:[%s731] sm:$0xff] %vm520, %v605
      %733 = vst.msk [vmem:[%s731 + $0x8] sm:$0xff] %vm520, %v608
      %734 = vst.msk [vmem:[%s731 + $0x10] sm:$0xff] %vm520, %v613
      %735 = vst.msk [vmem:[%s731 + $0x18] sm:$0xff] %vm520, %v616
      %736 = vst.msk [vmem:[%s731 + $0x20] sm:$0xff] %vm520, %v621
      %737 = vst.msk [vmem:[%s731 + $0x28] sm:$0xff] %vm520, %v624
      %738 = vst.msk [vmem:[%s731 + $0x30] sm:$0xff] %vm520, %v629
      %739 = vst.msk [vmem:[%s731 + $0x38] sm:$0xff] %vm520, %v632
      %740 = vst.msk [vmem:[%s731 + $0x40] sm:$0xff] %vm520, %v637
      %741 = vst.msk [vmem:[%s731 + $0x48] sm:$0xff] %vm520, %v640
      %742 = vst.msk [vmem:[%s731 + $0x50] sm:$0xff] %vm520, %v645
      %743 = vst.msk [vmem:[%s731 + $0x58] sm:$0xff] %vm520, %v648
      %744 = vst.msk [vmem:[%s731 + $0x60] sm:$0xff] %vm520, %v653
      %745 = vst.msk [vmem:[%s731 + $0x68] sm:$0xff] %vm520, %v656
      %746 = vst.msk [vmem:[%s731 + $0x70] sm:$0xff] %vm520, %v661
      %747 = vst.msk [vmem:[%s731 + $0x78] sm:$0xff] %vm520, %v664
      %748 = vst.msk [vmem:[%s731 + $0x80] sm:$0xff] %vm520, %v669
      %749 = vst.msk [vmem:[%s731 + $0x88] sm:$0xff] %vm520, %v672
      %750 = vst.msk [vmem:[%s731 + $0x90] sm:$0xff] %vm520, %v677
      %751 = vst.msk [vmem:[%s731 + $0x98] sm:$0xff] %vm520, %v680
      %752 = vst.msk [vmem:[%s731 + $0xa0] sm:$0xff] %vm520, %v685
      %753 = vst.msk [vmem:[%s731 + $0xa8] sm:$0xff] %vm520, %v688
      %754 = vst.msk [vmem:[%s731 + $0xb0] sm:$0xff] %vm520, %v693
      %755 = vst.msk [vmem:[%s731 + $0xb8] sm:$0xff] %vm520, %v696
      %756 = vst.msk [vmem:[%s731 + $0xc0] sm:$0xff] %vm520, %v701
      %757 = vst.msk [vmem:[%s731 + $0xc8] sm:$0xff] %vm520, %v704
      %758 = vst.msk [vmem:[%s731 + $0xd0] sm:$0xff] %vm520, %v709
      %759 = vst.msk [vmem:[%s731 + $0xd8] sm:$0xff] %vm520, %v712
      %760 = vst.msk [vmem:[%s731 + $0xe0] sm:$0xff] %vm520, %v717
      %761 = vst.msk [vmem:[%s731 + $0xe8] sm:$0xff] %vm520, %v720
      %762 = vst.msk [vmem:[%s731 + $0xf0] sm:$0xff] %vm520, %v725
      %763 = vst.msk [vmem:[%s731 + $0xf8] sm:$0xff] %vm520, %v728
      %s764 = scalar_lea.vmem %s1, 16
      %v765 = vld [vmem:[%s764] sm:$0xf]
      %v766 = vld [vmem:[%s764 + $0x4] sm:$0xf]
      %s767 = scalar_lea.vmem %s2, 2
      %v768 = vld [vmem:[%s767] sm:$0x1]
      %v770 = vlaneseq
      %v771 = vshrl.u32 %v770, 7
      %v772 = vsub.s32 0, %v771
      %v773 = vrot.slane %v768, %v772
      %v777 = vunpack.c.l.b16 %v765
      %v778 = vunpack.c.l.b16 %v766
      %v779 = vpack.c.b16 %v778, %v777
      %781 = vmatprep.subr.bf16.mxu0 0
      %782 = vmatpush1.bf16.msra.mxu0 %v779
      %783 = vmatprep.subr.bf16.mxu0 0
      %784 = vmatpush1.bf16.msra.mxu0 0
      %785 = vmatprep.subr.bf16.mxu0 0
      %786 = vmatpush1.bf16.msra.mxu0 0
      %787 = vmatprep.subr.bf16.mxu0 0
      %788 = vmatpush1.bf16.msra.mxu0 0
      %789 = vmatprep.subr.bf16.mxu0 0
      %790 = vmatpush1.bf16.msra.mxu0 0
      %791 = vmatprep.subr.bf16.mxu0 0
      %792 = vmatpush1.bf16.msra.mxu0 0
      %793 = vmatprep.subr.bf16.mxu0 0
      %794 = vmatpush1.bf16.msra.mxu0 0
      %795 = vmatprep.subr.bf16.mxu0 0
      %796 = vmatpush1.bf16.msra.mxu0 0
      %797 = vmatprep.subr.bf16.mxu0 0
      %798 = vmatpush1.bf16.msra.mxu0 0
      %799 = vmatprep.subr.bf16.mxu0 0
      %800 = vmatpush1.bf16.msra.mxu0 0
      %801 = vmatprep.subr.bf16.mxu0 0
      %802 = vmatpush1.bf16.msra.mxu0 0
      %803 = vmatprep.subr.bf16.mxu0 0
      %804 = vmatpush1.bf16.msra.mxu0 0
      %805 = vmatprep.subr.bf16.mxu0 0
      %806 = vmatpush1.bf16.msra.mxu0 0
      %807 = vmatprep.subr.bf16.mxu0 0
      %808 = vmatpush1.bf16.msra.mxu0 0
      %809 = vmatprep.subr.bf16.mxu0 0
      %810 = vmatpush1.bf16.msra.mxu0 0
      %811 = vmatprep.subr.bf16.mxu0 0
      %812 = vmatpush1.bf16.msra.mxu0 0
      %813 = vmatprep.mubr.bf16.mxu0 0
      %814 = vmatmul.mubr.bf16.gmra.mrb[0].mxu0 %v312
      %v815 = vpop.f32.mrb[0].mxu0
      %v816 = vadd.f32 %v773, %v815
      %v817 = vpop.f32.mrb[0].mxu0
      %v818 = vpop.f32.mrb[0].mxu0
      %v819 = vadd.f32 %v773, %v818
      %v820 = vpop.f32.mrb[0].mxu0
      %821 = vmatprep.mubr.bf16.mxu0 0
      %822 = vmatmul.mubr.bf16.gmra.mrb[0].mxu0 %v315
      %v823 = vpop.f32.mrb[0].mxu0
      %v824 = vadd.f32 %v773, %v823
      %v825 = vpop.f32.mrb[0].mxu0
      %v826 = vpop.f32.mrb[0].mxu0
      %v827 = vadd.f32 %v773, %v826
      %v828 = vpop.f32.mrb[0].mxu0
      %829 = vmatprep.mubr.bf16.mxu0 0
      %830 = vmatmul.mubr.bf16.gmra.mrb[0].mxu0 %v318
      %v831 = vpop.f32.mrb[0].mxu0
      %v832 = vadd.f32 %v773, %v831
      %v833 = vpop.f32.mrb[0].mxu0
      %v834 = vpop.f32.mrb[0].mxu0
      %v835 = vadd.f32 %v773, %v834
      %v836 = vpop.f32.mrb[0].mxu0
      %837 = vmatprep.mubr.bf16.mxu0 0
      %838 = vmatmul.mubr.bf16.gmra.mrb[0].mxu0 %v321
      %v839 = vpop.f32.mrb[0].mxu0
      %v840 = vadd.f32 %v773, %v839
      %v841 = vpop.f32.mrb[0].mxu0
      %v842 = vpop.f32.mrb[0].mxu0
      %v843 = vadd.f32 %v773, %v842
      %v844 = vpop.f32.mrb[0].mxu0
      %845 = vmatprep.mubr.bf16.mxu0 0
      %846 = vmatmul.mubr.bf16.gmra.mrb[0].mxu0 %v324
      %v847 = vpop.f32.mrb[0].mxu0
      %v848 = vadd.f32 %v773, %v847
      %v849 = vpop.f32.mrb[0].mxu0
      %v850 = vpop.f32.mrb[0].mxu0
      %v851 = vadd.f32 %v773, %v850
      %v852 = vpop.f32.mrb[0].mxu0
      %853 = vmatprep.mubr.bf16.mxu0 0
      %854 = vmatmul.mubr.bf16.gmra.mrb[0].mxu0 %v327
      %v855 = vpop.f32.mrb[0].mxu0
      %v856 = vadd.f32 %v773, %v855
      %v857 = vpop.f32.mrb[0].mxu0
      %v858 = vpop.f32.mrb[0].mxu0
      %v859 = vadd.f32 %v773, %v858
      %v860 = vpop.f32.mrb[0].mxu0
      %861 = vmatprep.mubr.bf16.mxu0 0
      %862 = vmatmul.mubr.bf16.gmra.mrb[0].mxu0 %v330
      %v863 = vpop.f32.mrb[0].mxu0
      %v864 = vadd.f32 %v773, %v863
      %v865 = vpop.f32.mrb[0].mxu0
      %v866 = vpop.f32.mrb[0].mxu0
      %v867 = vadd.f32 %v773, %v866
      %v868 = vpop.f32.mrb[0].mxu0
      %869 = vmatprep.mubr.bf16.mxu0 0
      %870 = vmatmul.mubr.bf16.gmra.mrb[0].mxu0 %v333
      %v871 = vpop.f32.mrb[0].mxu0
      %v872 = vadd.f32 %v773, %v871
      %v873 = vpop.f32.mrb[0].mxu0
      %v874 = vpop.f32.mrb[0].mxu0
      %v875 = vadd.f32 %v773, %v874
      %v876 = vpop.f32.mrb[0].mxu0
      %877 = vmatprep.mubr.bf16.mxu0 0
      %878 = vmatmul.mubr.bf16.gmra.mrb[0].mxu0 %v336
      %v879 = vpop.f32.mrb[0].mxu0
      %v880 = vadd.f32 %v773, %v879
      %v881 = vpop.f32.mrb[0].mxu0
      %v882 = vpop.f32.mrb[0].mxu0
      %v883 = vadd.f32 %v773, %v882
      %v884 = vpop.f32.mrb[0].mxu0
      %885 = vmatprep.mubr.bf16.mxu0 0
      %886 = vmatmul.mubr.bf16.gmra.mrb[0].mxu0 %v339
      %v887 = vpop.f32.mrb[0].mxu0
      %v888 = vadd.f32 %v773, %v887
      %v889 = vpop.f32.mrb[0].mxu0
      %v890 = vpop.f32.mrb[0].mxu0
      %v891 = vadd.f32 %v773, %v890
      %v892 = vpop.f32.mrb[0].mxu0
      %893 = vmatprep.mubr.bf16.mxu0 0
      %894 = vmatmul.mubr.bf16.gmra.mrb[0].mxu0 %v342
      %v895 = vpop.f32.mrb[0].mxu0
      %v896 = vadd.f32 %v773, %v895
      %v897 = vpop.f32.mrb[0].mxu0
      %v898 = vpop.f32.mrb[0].mxu0
      %v899 = vadd.f32 %v773, %v898
      %v900 = vpop.f32.mrb[0].mxu0
      %901 = vmatprep.mubr.bf16.mxu0 0
      %902 = vmatmul.mubr.bf16.gmra.mrb[0].mxu0 %v345
      %v903 = vpop.f32.mrb[0].mxu0
      %v904 = vadd.f32 %v773, %v903
      %v905 = vpop.f32.mrb[0].mxu0
      %v906 = vpop.f32.mrb[0].mxu0
      %v907 = vadd.f32 %v773, %v906
      %v908 = vpop.f32.mrb[0].mxu0
      %909 = vmatprep.mubr.bf16.mxu0 0
      %910 = vmatmul.mubr.bf16.gmra.mrb[0].mxu0 %v348
      %v911 = vpop.f32.mrb[0].mxu0
      %v912 = vadd.f32 %v773, %v911
      %v913 = vpop.f32.mrb[0].mxu0
      %v914 = vpop.f32.mrb[0].mxu0
      %v915 = vadd.f32 %v773, %v914
      %v916 = vpop.f32.mrb[0].mxu0
      %917 = vmatprep.mubr.bf16.mxu0 0
      %918 = vmatmul.mubr.bf16.gmra.mrb[0].mxu0 %v351
      %v919 = vpop.f32.mrb[0].mxu0
      %v920 = vadd.f32 %v773, %v919
      %v921 = vpop.f32.mrb[0].mxu0
      %v922 = vpop.f32.mrb[0].mxu0
      %v923 = vadd.f32 %v773, %v922
      %v924 = vpop.f32.mrb[0].mxu0
      %925 = vmatprep.mubr.bf16.mxu0 0
      %926 = vmatmul.mubr.bf16.gmra.mrb[0].mxu0 %v354
      %v927 = vpop.f32.mrb[0].mxu0
      %v928 = vadd.f32 %v773, %v927
      %v929 = vpop.f32.mrb[0].mxu0
      %v930 = vpop.f32.mrb[0].mxu0
      %v931 = vadd.f32 %v773, %v930
      %v932 = vpop.f32.mrb[0].mxu0
      %933 = vmatprep.mubr.bf16.mxu0 0
      %934 = vmatmul.mubr.bf16.gmra.mrb[0].mxu0 %v357
      %v935 = vpop.f32.mrb[0].mxu0
      %v936 = vadd.f32 %v773, %v935
      %v937 = vpop.f32.mrb[0].mxu0
      %v938 = vpop.f32.mrb[0].mxu0
      %v939 = vadd.f32 %v773, %v938
      %v940 = vpop.f32.mrb[0].mxu0
      %941 = vdwg.mxu0
      %s942 = scalar_lea.vmem %s208, 512
      %943 = vst.msk [vmem:[%s942] sm:$0xff] %vm520, %v816
      %944 = vst.msk [vmem:[%s942 + $0x8] sm:$0xff] %vm520, %v819
      %945 = vst.msk [vmem:[%s942 + $0x10] sm:$0xff] %vm520, %v824
      %946 = vst.msk [vmem:[%s942 + $0x18] sm:$0xff] %vm520, %v827
      %947 = vst.msk [vmem:[%s942 + $0x20] sm:$0xff] %vm520, %v832
      %948 = vst.msk [vmem:[%s942 + $0x28] sm:$0xff] %vm520, %v835
      %949 = vst.msk [vmem:[%s942 + $0x30] sm:$0xff] %vm520, %v840
      %950 = vst.msk [vmem:[%s942 + $0x38] sm:$0xff] %vm520, %v843
      %951 = vst.msk [vmem:[%s942 + $0x40] sm:$0xff] %vm520, %v848
      %952 = vst.msk [vmem:[%s942 + $0x48] sm:$0xff] %vm520, %v851
      %953 = vst.msk [vmem:[%s942 + $0x50] sm:$0xff] %vm520, %v856
      %954 = vst.msk [vmem:[%s942 + $0x58] sm:$0xff] %vm520, %v859
      %955 = vst.msk [vmem:[%s942 + $0x60] sm:$0xff] %vm520, %v864
      %956 = vst.msk [vmem:[%s942 + $0x68] sm:$0xff] %vm520, %v867
      %957 = vst.msk [vmem:[%s942 + $0x70] sm:$0xff] %vm520, %v872
      %958 = vst.msk [vmem:[%s942 + $0x78] sm:$0xff] %vm520, %v875
      %959 = vst.msk [vmem:[%s942 + $0x80] sm:$0xff] %vm520, %v880
      %960 = vst.msk [vmem:[%s942 + $0x88] sm:$0xff] %vm520, %v883
      %961 = vst.msk [vmem:[%s942 + $0x90] sm:$0xff] %vm520, %v888
      %962 = vst.msk [vmem:[%s942 + $0x98] sm:$0xff] %vm520, %v891
      %963 = vst.msk [vmem:[%s942 + $0xa0] sm:$0xff] %vm520, %v896
      %964 = vst.msk [vmem:[%s942 + $0xa8] sm:$0xff] %vm520, %v899
      %965 = vst.msk [vmem:[%s942 + $0xb0] sm:$0xff] %vm520, %v904
      %966 = vst.msk [vmem:[%s942 + $0xb8] sm:$0xff] %vm520, %v907
      %967 = vst.msk [vmem:[%s942 + $0xc0] sm:$0xff] %vm520, %v912
      %968 = vst.msk [vmem:[%s942 + $0xc8] sm:$0xff] %vm520, %v915
      %969 = vst.msk [vmem:[%s942 + $0xd0] sm:$0xff] %vm520, %v920
      %970 = vst.msk [vmem:[%s942 + $0xd8] sm:$0xff] %vm520, %v923
      %971 = vst.msk [vmem:[%s942 + $0xe0] sm:$0xff] %vm520, %v928
      %972 = vst.msk [vmem:[%s942 + $0xe8] sm:$0xff] %vm520, %v931
      %973 = vst.msk [vmem:[%s942 + $0xf0] sm:$0xff] %vm520, %v936
      %974 = vst.msk [vmem:[%s942 + $0xf8] sm:$0xff] %vm520, %v939
      %s975 = smul.u32 32, %s18
      %p976 = scmp.lt.s32.totalorder %s19, 1
      %s977 = scalar_select %p976, %s19, 1
      %p978 = scmp.lt.s32.totalorder %s975, 31
      %s979 = scalar_select %p978, %s975, 31
      %s980 = smul.addr %s977, 96
      %s981 = sadd.s32 %s979, %s980
      %s982 = smul.addr %s981, 8
      %s983 = scalar_lea.vmem %s3, %s982
      // Predicated region
      $region33: #{_detect_level.1} parent=31 // pred_check
        %p984 = pneg %p116
      $region34: #{_detect_level.1} parent=31 // pred_check_branch
        %986 = sbr.rel (%p984) target = $region36
      $region35: #{_detect_level.1} parent=31 // pred_region
        %s987 = smul.u32 32, %s18
      $region36: #{_detect_level.1} parent=31 // pred_fallthru
        _
    $region32: #{_detect_level.1} parent=5 // pred_fallthru
      _
    %p988 = scmp.le.s32.totalorder 2, %s9
    // Predicated region
    $region37: #{_detect_level.1} parent=5 // pred_check
      %p989 = pneg %p988
    $region38: #{_detect_level.1} parent=5 // pred_check_branch
      %991 = sbr.rel (%p989) target = $region40
    $region39: #{_detect_level.1} parent=5 // pred_region
      %s992 = ssub.s32 %s9, 2
      // Predicated region
      $region41: #{_detect_level.1} parent=39 // pred_check
        %p993 = pneg %p122
      $region42: #{_detect_level.1} parent=39 // pred_check_branch
        %995 = sbr.rel (%p993) target = $region44
      $region43: #{_detect_level.1} parent=39 // pred_region
        %s996 = smul.u32 32, %s20
        %p997 = scmp.lt.s32.totalorder %s21, 1
        %s998 = scalar_select %p997, %s21, 1
        %p999 = scmp.lt.s32.totalorder %s996, 31
        %s1000 = scalar_select %p999, %s996, 31
        %s1001 = smul.addr %s998, 96
        %s1002 = sadd.s32 %s1000, %s1001
        %s1003 = smul.addr %s1002, 8
        %s1004 = scalar_lea.vmem %s3, %s1003
      $region44: #{_detect_level.1} parent=39 // pred_fallthru
        _
    $region40: #{_detect_level.1} parent=5 // pred_fallthru
      _
  $region6: #{_detect_level.1} parent=0 // loop_footer
    %s13 = sadd.s32 1, %s9
  $region7: #{_detect_level.1} parent=0 // loop_footer_branch
    %8 = sbr.rel target = $region3
  $region8: #{_detect_level.1} parent=0 // loop_exit
    _

</llo_original>
